<compile_context>
chip_gen: v7x
topology: tpu7x:2x2x1
jax: 0.10.0
libtpu: 0.0.40
codegen_flags: <defaults>
</compile_context>

<pallas_src>
import functools

import numpy as np
import jax
import jax.numpy as jnp
from jax.experimental import pallas as pl
from jax.experimental.pallas import tpu as pltpu


# ----------------------------------------------------------------------------
# Host-side glue: interpolation matrix matching torch.nn.functional.interpolate
# (align_corners=False defaults), so that  forecast = knots @ W.
# ----------------------------------------------------------------------------
def _cubic_conv1(x, a):
    return ((a + 2.0) * x - (a + 3.0)) * x * x + 1.0


def _cubic_conv2(x, a):
    return (((a * x - 5.0 * a) * x) + 8.0 * a) * x - 4.0 * a


@functools.lru_cache(maxsize=None)
def make_interp_matrix(n_knots: int, forecast_size: int, mode: str) -> np.ndarray:
    W = np.zeros((n_knots, forecast_size), dtype=np.float32)
    scale = n_knots / forecast_size
    if mode == "nearest":
        for j in range(forecast_size):
            src = min(int(np.floor(j * scale)), n_knots - 1)
            W[src, j] = 1.0
    elif mode == "linear":
        for j in range(forecast_size):
            src = max((j + 0.5) * scale - 0.5, 0.0)
            i0 = min(int(np.floor(src)), n_knots - 1)
            i1 = i0 + 1 if i0 < n_knots - 1 else i0
            lam1 = src - i0
            W[i0, j] += 1.0 - lam1
            W[i1, j] += lam1
    elif "cubic" in mode:
        # bicubic on (N,1,1,L): the size-1 height dim is the identity, so this
        # is 1-D cubic convolution (a=-0.75) along L with border replication.
        # TODO(synk): double-check edge behaviour vs torch for n_knots < 4 and
        # heavy downsampling (forecast_size << n_knots).
        a = -0.75
        for j in range(forecast_size):
            src = (j + 0.5) * scale - 0.5          # not clamped for cubic
            i0 = int(np.floor(src))
            t = src - i0
            coeffs = (_cubic_conv2(t + 1.0, a), _cubic_conv1(t, a),
                      _cubic_conv1(1.0 - t, a), _cubic_conv2(2.0 - t, a))
            for k, c in enumerate(coeffs):
                idx = min(max(i0 - 1 + k, 0), n_knots - 1)
                W[idx, j] += c
    else:
        raise ValueError(f"unsupported interpolation mode: {mode}")
    return W


def _round_up(x: int, m: int) -> int:
    return (x + m - 1) // m * m


# ----------------------------------------------------------------------------
# Pallas kernel: forecast tile = knots tile @ W  (lane-dense padded output).
# ----------------------------------------------------------------------------
def _forecast_kernel(n_knots: int, use_mxu: bool, knots_ref, w_ref, out_ref):
    if use_mxu:
        out_ref[...] = jnp.dot(
            knots_ref[...].astype(jnp.float32), w_ref[...],
            preferred_element_type=jnp.float32,
        ).astype(out_ref.dtype)
    else:
        # Tiny contraction (K < 8): a handful of VPU FMAs in otherwise-idle
        # VALU slots instead of wasting the MXU on a K=4 matmul.
        w = w_ref[...]
        acc = knots_ref[:, 0:1].astype(jnp.float32) * w[0:1, :]
        for k in range(1, n_knots):
            acc = acc + knots_ref[:, k:k + 1].astype(jnp.float32) * w[k:k + 1, :]
        out_ref[...] = acc.astype(out_ref.dtype)


# ----------------------------------------------------------------------------
# Wrapper: semantics of _IdentityBasis.forward(theta) -> (backcast, forecast).
# ----------------------------------------------------------------------------
def identity_basis_forward(theta: jax.Array, backcast_size: int, forecast_size: int,
                           interpolation_mode: str = "linear"):
    batch, width = theta.shape
    n_knots = width - backcast_size
    assert n_knots >= 1, "theta must contain at least one knot"

    # backcast is a pure identity slice; let XLA do it at HBM bandwidth
    # instead of DMA'ing those bytes into VMEM and straight back out.
    backcast = theta[:, :backcast_size]
    knots = theta[:, backcast_size:]               # (batch, n_knots), tiny

    dt = theta.dtype
    dt_bytes = jnp.dtype(dt).itemsize
    sublane = {4: 8, 2: 16, 1: 32}.get(dt_bytes, 8)

    # Lane-dense output: pad forecast axis up to a multiple of 128 so stores
    # lower to full unmasked vst; padding (zero W columns) sliced off below.
    f_pad = _round_up(forecast_size, 128)

    w_np = make_interp_matrix(n_knots, forecast_size, interpolation_mode)
    if f_pad != forecast_size:
        w_np = np.pad(w_np, ((0, 0), (0, f_pad - forecast_size)))
    W = jnp.asarray(w_np, dtype=jnp.float32)       # keep weights in f32

    # Batch tile: large enough for good pipelining, bounded so the
    # double-buffered working set fits every generation's scoped-VMEM default.
    tb = 512 if batch > 512 else _round_up(batch, sublane)
    while tb > sublane and 2 * tb * (f_pad + n_knots) * dt_bytes > (8 << 20):
        tb = max(sublane, tb // 2)
    tb = _round_up(tb, sublane)

    b_pad = _round_up(max(batch, tb), tb)
    if b_pad != batch:
        knots = jnp.pad(knots, ((0, b_pad - batch), (0, 0)))

    use_mxu = n_knots >= 8
    kernel = functools.partial(_forecast_kernel, n_knots, use_mxu)

    cost = pl.CostEstimate(
        flops=2 * b_pad * n_knots * f_pad,
        transcendentals=0,
        bytes_accessed=(b_pad * n_knots + b_pad * f_pad) * dt_bytes
        + n_knots * f_pad * 4,
    )

    forecast_padded = pl.pallas_call(
        kernel,
        out_shape=jax.ShapeDtypeStruct((b_pad, f_pad), dt),
        grid=(b_pad // tb,),
        in_specs=[
            pl.BlockSpec((tb, n_knots), lambda i: (i, 0)),     # knots tile
            pl.BlockSpec((n_knots, f_pad), lambda i: (0, 0)),  # W, resident
        ],
        out_specs=pl.BlockSpec((tb, f_pad), lambda i: (i, 0)),
        compiler_params=pltpu.CompilerParams(
            dimension_semantics=("parallel",),
        ),
        cost_estimate=cost,
    )(knots, W)

    forecast = forecast_padded[:batch, :forecast_size]
    return backcast, forecast


if __name__ == "__main__":
    # Small shapes consistent with NHITS: theta = concat(backcast, knots).
    batch = 8
    backcast_size = 16
    n_knots = 4
    forecast_size = 12

    key = jax.random.PRNGKey(0)
    theta = jax.random.normal(key, (batch, backcast_size + n_knots), dtype=jnp.float32)

    backcast, forecast = identity_basis_forward(
        theta, backcast_size, forecast_size, interpolation_mode="linear"
    )
    jax.block_until_ready((backcast, forecast))

    assert backcast.shape == (batch, backcast_size)
    assert forecast.shape == (batch, forecast_size)
    assert bool(jnp.allclose(backcast, theta[:, :backcast_size]))

    # Pure-JAX reference for each interpolation mode (VPU path, n_knots=4).
    for mode in ("linear", "nearest", "cubic"):
        b_m, f_m = identity_basis_forward(theta, backcast_size, forecast_size, mode)
        jax.block_until_ready((b_m, f_m))
        W_ref = jnp.asarray(make_interp_matrix(n_knots, forecast_size, mode))
        fcst_ref = theta[:, backcast_size:] @ W_ref
        assert bool(jnp.allclose(f_m, fcst_ref, atol=1e-5, rtol=1e-5)), mode

    # Ragged batch (exercises batch padding) + MXU path (n_knots >= 8).
    theta2 = jax.random.normal(jax.random.PRNGKey(0), (10, 24 + 16), dtype=jnp.float32)
    b3, f3 = identity_basis_forward(theta2, 24, 20, "linear")
    jax.block_until_ready((b3, f3))
    assert b3.shape == (10, 24) and f3.shape == (10, 20)
    W3 = jnp.asarray(make_interp_matrix(16, 20, "linear"))
    assert bool(jnp.allclose(f3, theta2[:, 24:] @ W3, atol=1e-5, rtol=1e-5))
    assert bool(jnp.allclose(b3, theta2[:, :24]))

    print("KERNEL_OK")
</pallas_src>

<mosaic_0001>
module attributes {stable_mosaic.version = 11 : i64} {
  func.func @_forecast_kernel(%arg0: i32, %arg1: memref<8x4xf32, #tpu.memory_space<vmem>>, %arg2: memref<4x128xf32, #tpu.memory_space<vmem>>, %arg3: memref<8x128xf32, #tpu.memory_space<vmem>>) attributes {dimension_semantics = [#tpu.dimension_semantics<parallel>], iteration_bounds = array<i64: 1>, scalar_prefetch = 0 : i64, scratch_operands = 0 : i64, tpu.core_type = #tpu.core_type<tc>, window_params = [{transform_indices = @transform_0, window_bounds = array<i64: 8, 4>}, {pipeline_mode = #tpu.pipeline_mode<synchronous>, transform_indices = @transform_1, window_bounds = array<i64: 4, 128>}, {transform_indices = @transform_2, window_bounds = array<i64: 8, 128>}]} {
    %c0 = arith.constant 0 : index
    %c0_0 = arith.constant 0 : index
    %0 = vector.load %arg2[%c0, %c0_0] : memref<4x128xf32, #tpu.memory_space<vmem>>, vector<4x128xf32>
    %c0_1 = arith.constant 0 : index
    %c0_2 = arith.constant 0 : index
    %1 = vector.load %arg1[%c0_1, %c0_2] : memref<8x4xf32, #tpu.memory_space<vmem>>, vector<8x1xf32>
    %2 = vector.extract_strided_slice %0 {offsets = [0, 0], sizes = [1, 128], strides = [1, 1]} : vector<4x128xf32> to vector<1x128xf32>
    %3 = vector.broadcast %1 : vector<8x1xf32> to vector<8x128xf32>
    %4 = vector.broadcast %2 : vector<1x128xf32> to vector<8x128xf32>
    %5 = arith.mulf %3, %4 : vector<8x128xf32>
    %c0_3 = arith.constant 0 : index
    %c1 = arith.constant 1 : index
    %6 = vector.load %arg1[%c0_3, %c1] : memref<8x4xf32, #tpu.memory_space<vmem>>, vector<8x1xf32>
    %7 = vector.extract_strided_slice %0 {offsets = [1, 0], sizes = [1, 128], strides = [1, 1]} : vector<4x128xf32> to vector<1x128xf32>
    %8 = vector.broadcast %6 : vector<8x1xf32> to vector<8x128xf32>
    %9 = vector.broadcast %7 : vector<1x128xf32> to vector<8x128xf32>
    %10 = arith.mulf %8, %9 : vector<8x128xf32>
    %11 = arith.addf %5, %10 : vector<8x128xf32>
    %c0_4 = arith.constant 0 : index
    %c2 = arith.constant 2 : index
    %12 = vector.load %arg1[%c0_4, %c2] : memref<8x4xf32, #tpu.memory_space<vmem>>, vector<8x1xf32>
    %13 = vector.extract_strided_slice %0 {offsets = [2, 0], sizes = [1, 128], strides = [1, 1]} : vector<4x128xf32> to vector<1x128xf32>
    %14 = vector.broadcast %12 : vector<8x1xf32> to vector<8x128xf32>
    %15 = vector.broadcast %13 : vector<1x128xf32> to vector<8x128xf32>
    %16 = arith.mulf %14, %15 : vector<8x128xf32>
    %17 = arith.addf %11, %16 : vector<8x128xf32>
    %c0_5 = arith.constant 0 : index
    %c3 = arith.constant 3 : index
    %18 = vector.load %arg1[%c0_5, %c3] : memref<8x4xf32, #tpu.memory_space<vmem>>, vector<8x1xf32>
    %19 = vector.extract_strided_slice %0 {offsets = [3, 0], sizes = [1, 128], strides = [1, 1]} : vector<4x128xf32> to vector<1x128xf32>
    %20 = vector.broadcast %18 : vector<8x1xf32> to vector<8x128xf32>
    %21 = vector.broadcast %19 : vector<1x128xf32> to vector<8x128xf32>
    %22 = arith.mulf %20, %21 : vector<8x128xf32>
    %23 = arith.addf %17, %22 : vector<8x128xf32>
    %c0_6 = arith.constant 0 : index
    %c0_7 = arith.constant 0 : index
    %24 = vector.load %arg3[%c0_6, %c0_7] : memref<8x128xf32, #tpu.memory_space<vmem>>, vector<8x128xf32>
    tpu.vector_store %arg3[%c0_6, %c0_7], %23 {strides = array<i32>} : memref<8x128xf32, #tpu.memory_space<vmem>>, vector<8x128xf32>,
    return
  }
  func.func @transform_0(%arg0: i32) -> (i32, i32) {
    %c0_i32 = arith.constant 0 : i32
    %c0_i32_0 = arith.constant 0 : i32
    return %arg0, %c0_i32 : i32, i32
  }
  func.func @transform_1(%arg0: i32) -> (i32, i32) {
    %c0_i32 = arith.constant 0 : i32
    %c0_i32_0 = arith.constant 0 : i32
    %c0_i32_1 = arith.constant 0 : i32
    return %c0_i32, %c0_i32_0 : i32, i32
  }
  func.func @transform_2(%arg0: i32) -> (i32, i32) {
    %c0_i32 = arith.constant 0 : i32
    %c0_i32_0 = arith.constant 0 : i32
    return %arg0, %c0_i32 : i32, i32
  }
}

</mosaic_0001>

<llo_original>
// kernel: tpu_custom_call.1
$region0: #{tpu_custom_call.1}
  #allocation0 [shape = 'u32[]', space=smem, size = 0x4, offset = 0x4, fixed_abs, tag = 'smem constant byte address 0x4 - core index']
  #allocation1 [shape = 'u32[144,128]{1,0:T(1,128)}', space=vmem, size = 0x12000, scoped, tag = 'internal scratch']
  %s0 = inlined_call_operand.vmem [shape: f32[8,4], index: 0, kind: input, shape index: {}]
  %s1 = inlined_call_operand.vmem [shape: f32[4,128], index: 1, kind: input, shape index: {}]
  %s2 = inlined_call_operand.hbm [shape: f32[8,128], index: 2, kind: output, shape index: {}]
  %s3 = sld [smem:[#allocation0]]
  $region18: #{tpu_custom_call.1} parent=0
    _
  %s5 = ssub.s32 1, %s3
  %s6 = scalar_select 0, %s5, %s3
  $region1: #{tpu_custom_call.1} parent=0
    #allocation2 [shape = 'u8[4096]{0}', space=vmem, size = 0x1000, scoped, tag = 'output window, operand 0, single buffered']
    #allocation3 [shape = 's32[1]{0}', space=sflag, size = 0x4, scoped, tag = 'scoped memory for tpu_custom_call.1']
    %7 = vsyncpa [#allocation3], 0
    // Predicated region
    $region2: #{tpu_custom_call.1} parent=1 // pred_check
      _
    $region3: #{tpu_custom_call.1} parent=1 // pred_check_branch
      %9 = sbr.rel (0) target = $region5
    $region4: #{tpu_custom_call.1} parent=1 // pred_region
      _
    $region5: #{tpu_custom_call.1} parent=1 // pred_fallthru
      _
    // Predicated region
    $region6: #{tpu_custom_call.1} parent=1 // pred_check
      _
    $region7: #{tpu_custom_call.1} parent=1 // pred_check_branch
      %11 = sbr.rel (0) target = $region9
    $region8: #{tpu_custom_call.1} parent=1 // pred_region
      _
    $region9: #{tpu_custom_call.1} parent=1 // pred_fallthru
      _
    %v12 = vld [vmem:[%s1] sm:$0xf]
    %v13 = vld [vmem:[%s0] sm:$0xff]
    %15 = vset.pattern.permute.xlu0 0
    %16 = vperm.xlu0 %15, %v13
    %v17 = vpop.permute.xlu0 %16
    %v19 = vlaneseq
    %v20 = vshrl.u32 %v19, 7
    %v21 = vsub.s32 0, %v20
    %v22 = vrot.slane %v12, %v21
    %v23 = vmul.f32 %v17, %v22
    %24 = vset.pattern.permute.xlu0 1
    %25 = vperm.xlu0 %24, %v13
    %v26 = vpop.permute.xlu0 %25
    %v28 = vlaneseq
    %v29 = vshrl.u32 %v28, 7
    %v30 = vsub.s32 1, %v29
    %v31 = vrot.slane %v12, %v30
    %v32 = vmul.f32 %v26, %v31
    %v33 = vadd.f32 %v23, %v32
    %34 = vset.pattern.permute.xlu0 2
    %35 = vperm.xlu0 %34, %v13
    %v36 = vpop.permute.xlu0 %35
    %v38 = vlaneseq
    %v39 = vshrl.u32 %v38, 7
    %v40 = vsub.s32 2, %v39
    %v41 = vrot.slane %v12, %v40
    %v42 = vmul.f32 %v36, %v41
    %v43 = vadd.f32 %v33, %v42
    %44 = vset.pattern.permute.xlu0 3
    %45 = vperm.xlu0 %44, %v13
    %v46 = vpop.permute.xlu0 %45
    %v48 = vlaneseq
    %v49 = vshrl.u32 %v48, 7
    %v50 = vsub.s32 3, %v49
    %v51 = vrot.slane %v12, %v50
    %v52 = vmul.f32 %v46, %v51
    %v53 = vadd.f32 %v43, %v52
    %54 = vst [vmem:[#allocation2] sm:$0xff] %v53
    // Predicated region
    $region10: #{tpu_custom_call.1} parent=1 // pred_check
      _
    $region11: #{tpu_custom_call.1} parent=1 // pred_check_branch
      %56 = sbr.rel (0) target = $region13
    $region12: #{tpu_custom_call.1} parent=1 // pred_region
      %s58 = ssub.s32 128, 128
      %59 = vsyncadd [#allocation3], %s58
      %s61 = sshll.u32 [#allocation2], 4
      %s62 = int_to_ptr.vmem [resolvable:$true] %s61
      %64 = dma.vmem_to_hbm [thread:$0]  %s62, 128, %s2, [#allocation3]
    $region13: #{tpu_custom_call.1} parent=1 // pred_fallthru
      _
    // Predicated region
    $region14: #{tpu_custom_call.1} parent=1 // pred_check
      _
    $region15: #{tpu_custom_call.1} parent=1 // pred_check_branch
      %66 = sbr.rel (0) target = $region17
    $region16: #{tpu_custom_call.1} parent=1 // pred_region
      %67 = dma.done [#allocation3], 128
    $region17: #{tpu_custom_call.1} parent=1 // pred_fallthru
      _
    %68 = vsyncpa [#allocation3], 1

</llo_original>
